<compile_context>
chip_gen: v5e
topology: v5e:2x2
jax: 0.10.0
libtpu: 0.0.40
codegen_flags: <defaults>
</compile_context>

<pallas_src>
import jax
import jax.numpy as jnp
from jax.experimental import pallas as pl
from jax.experimental.pallas import tpu as pltpu


def gcn_kernel(mat_ref, x_ref, w1_ref, w2_ref, slab_ref):
    N, F = x_ref.shape
    H = w1_ref.shape[1]
    C = w2_ref.shape[1]

    # Cast MXU operands to bf16 in-kernel (VPU work, hidden under MXU).
    mat = mat_ref[...].astype(jnp.bfloat16)                  # [N, N]
    x = x_ref[...].astype(jnp.bfloat16)                      # [N, F]
    w1 = w1_ref[...].astype(jnp.bfloat16)                    # [F, H]
    w2 = w2_ref[...].astype(jnp.bfloat16)                    # [H, C]

    # ---- layer 1: mat @ x @ W1 (reassociated when F <= H) -----------------
    if F <= H:
        # (mat @ x) @ W1 : N*N contraction width is F instead of H.
        mx = jnp.dot(mat, x, preferred_element_type=jnp.float32)     # [N, F]
        h = jnp.dot(mx.astype(jnp.bfloat16), w1,
                    preferred_element_type=jnp.float32)              # [N, H]
    else:
        xw1 = jnp.dot(x, w1, preferred_element_type=jnp.float32)     # [N, H]
        h = jnp.dot(mat, xw1.astype(jnp.bfloat16),
                    preferred_element_type=jnp.float32)
    hid = jnp.maximum(h, 0.0)                                        # relu, f32

    # Dropout is identity at inference (training=False).
    # TODO(synk): training-mode dropout needs pltpu.prng_seed/prng_random_bits.

    # ---- layer 2: bef = mat @ hid (required output), fin = bef @ W2 -------
    # (keep this association: bef_linear2 is returned by the module, so the
    #  mat @ (hid @ W2) reassociation would not save the N*N matmul)
    bef = jnp.dot(mat, hid.astype(jnp.bfloat16),
                  preferred_element_type=jnp.float32)                # [N, H]
    fin = jnp.dot(bef.astype(jnp.bfloat16), w2,
                  preferred_element_type=jnp.float32)                # [N, C]

    # ---- log_softmax over classes (dim=1), numerically stable, f32 --------
    m = jnp.max(fin, axis=1, keepdims=True)
    s = fin - m
    lse = jnp.log(jnp.sum(jnp.exp(s), axis=1, keepdims=True))
    logp = s - lse

    # ---- single lane-dense packed store ------------------------------------
    pad = slab_ref.shape[1] - (2 * H + 2 * C)
    pieces = [hid, bef, fin, logp]
    if pad > 0:
        pieces.append(jnp.zeros((N, pad), jnp.float32))
    slab_ref[...] = jnp.concatenate(pieces, axis=1)


def matrix_gcn_forward(mat, x, w1, w2, multilabel=False):
    N, F = x.shape
    H = w1.shape[1]
    C = w2.shape[1]
    packed_w = pl.cdiv(2 * H + 2 * C, 128) * 128       # lane-dense slab width

    def _full(shape):
        n = len(shape)
        return pl.BlockSpec(shape, lambda: (0,) * n)

    slab = pl.pallas_call(
        gcn_kernel,
        out_shape=jax.ShapeDtypeStruct((N, packed_w), jnp.float32),
        grid=(),
        in_specs=[_full((N, N)), _full((N, F)), _full((F, H)), _full((H, C))],
        out_specs=_full((N, packed_w)),
        compiler_params=pltpu.CompilerParams(vmem_limit_bytes=32 * 1024 * 1024),
    )(mat, x, w1, w2)

    hid = slab[:, :H]
    bef = slab[:, H:2 * H]
    fin = slab[:, 2 * H:2 * H + C]
    logp = slab[:, 2 * H + C:2 * H + 2 * C]
    out = fin if multilabel else logp
    return (hid, bef, fin), out


# ---------------------------------------------------------------- glue / init

def convert_edge2adj(edge_index, num_nodes):
    """Dense adjacency from edge_index [2, E] (symmetrized)."""
    adj = jnp.zeros((num_nodes, num_nodes), jnp.float32)
    src, dst = edge_index[0], edge_index[1]
    adj = adj.at[src, dst].set(1.0)
    adj = adj.at[dst, src].set(1.0)
    return adj


def normalize(mat):
    """Row-normalize: D^-1 * A."""
    rowsum = jnp.sum(mat, axis=1, keepdims=True)
    r_inv = jnp.where(rowsum > 0, 1.0 / rowsum, 0.0)
    return mat * r_inv


def xavier_uniform(key, shape):
    fan_in, fan_out = shape
    bound = jnp.sqrt(6.0 / (fan_in + fan_out))
    return jax.random.uniform(key, shape, jnp.float32, -bound, bound)


if __name__ == "__main__":
    num_nodes, num_features, hid_dim, num_classes = 16, 8, 32, 4

    key = jax.random.PRNGKey(0)
    k_x, k_e, k_w1, k_w2 = jax.random.split(key, 4)

    # synthetic graph: ring edges + a few random ones
    ring_src = jnp.arange(num_nodes, dtype=jnp.int32)
    ring_dst = (ring_src + 1) % num_nodes
    rand_src = jax.random.randint(k_e, (8,), 0, num_nodes, dtype=jnp.int32)
    rand_dst = (rand_src + 3) % num_nodes
    edge_index = jnp.stack(
        [jnp.concatenate([ring_src, rand_src]),
         jnp.concatenate([ring_dst, rand_dst])], axis=0)

    # parameters (deterministic init, matching module shapes)
    mat = normalize(convert_edge2adj(edge_index, num_nodes)
                    + jnp.eye(num_nodes, dtype=jnp.float32))
    w1 = xavier_uniform(k_w1, (num_features, hid_dim))
    w2 = xavier_uniform(k_w2, (hid_dim, num_classes))

    x = jax.random.normal(k_x, (num_nodes, num_features), jnp.float32)

    fwd = jax.jit(matrix_gcn_forward)
    (hid_x, bef_linear2, fin_x), out = fwd(mat, x, w1, w2)
    jax.block_until_ready(out)

    # correctness check vs. plain-JAX f32 reference (original association);
    # tolerances loosened for bf16 MXU operands + reassociation.
    h_ref = jnp.maximum(mat @ (x @ w1), 0.0)
    bef_ref = mat @ h_ref
    fin_ref = bef_ref @ w2
    out_ref = jax.nn.log_softmax(fin_ref, axis=1)
    tol = dict(rtol=5e-2, atol=5e-2)
    assert jnp.allclose(hid_x, h_ref, **tol)
    assert jnp.allclose(bef_linear2, bef_ref, **tol)
    assert jnp.allclose(fin_x, fin_ref, **tol)
    assert jnp.allclose(out, out_ref, **tol)

    print("KERNEL_OK")
</pallas_src>

<mosaic_0001>
module attributes {stable_mosaic.version = 11 : i64} {
  func.func @gcn_kernel(%arg0: memref<16x16xf32, #tpu.memory_space<vmem>>, %arg1: memref<16x8xf32, #tpu.memory_space<vmem>>, %arg2: memref<8x32xf32, #tpu.memory_space<vmem>>, %arg3: memref<32x4xf32, #tpu.memory_space<vmem>>, %arg4: memref<16x128xf32, #tpu.memory_space<vmem>>) attributes {dimension_semantics = [], scalar_prefetch = 0 : i64, scratch_operands = 0 : i64, tpu.core_type = #tpu.core_type<tc>} {
    %c0 = arith.constant 0 : index
    %c0_0 = arith.constant 0 : index
    %0 = vector.load %arg0[%c0, %c0_0] : memref<16x16xf32, #tpu.memory_space<vmem>>, vector<16x16xf32>
    %1 = arith.truncf %0 : vector<16x16xf32> to vector<16x16xbf16>
    %c0_1 = arith.constant 0 : index
    %c0_2 = arith.constant 0 : index
    %2 = vector.load %arg1[%c0_1, %c0_2] : memref<16x8xf32, #tpu.memory_space<vmem>>, vector<16x8xf32>
    %3 = arith.truncf %2 : vector<16x8xf32> to vector<16x8xbf16>
    %c0_3 = arith.constant 0 : index
    %c0_4 = arith.constant 0 : index
    %4 = vector.load %arg2[%c0_3, %c0_4] : memref<8x32xf32, #tpu.memory_space<vmem>>, vector<8x32xf32>
    %5 = arith.truncf %4 : vector<8x32xf32> to vector<8x32xbf16>
    %c0_5 = arith.constant 0 : index
    %c0_6 = arith.constant 0 : index
    %6 = vector.load %arg3[%c0_5, %c0_6] : memref<32x4xf32, #tpu.memory_space<vmem>>, vector<32x4xf32>
    %7 = arith.truncf %6 : vector<32x4xf32> to vector<32x4xbf16>
    %cst = arith.constant dense<0.000000e+00> : vector<16x8xf32>
    %8 = tpu.matmul %1, %3, %cst {dimension_numbers = #tpu.dot_dimension_numbers<[1], [0], [0], [1], [0, 0, 1, 1], [], []>} : vector<16x16xbf16>, vector<16x8xbf16>, vector<16x8xf32> -> vector<16x8xf32>
    %9 = arith.truncf %8 : vector<16x8xf32> to vector<16x8xbf16>
    %cst_7 = arith.constant dense<0.000000e+00> : vector<16x32xf32>
    %10 = tpu.matmul %9, %5, %cst_7 {dimension_numbers = #tpu.dot_dimension_numbers<[1], [0], [0], [1], [0, 0, 1, 1], [], []>} : vector<16x8xbf16>, vector<8x32xbf16>, vector<16x32xf32> -> vector<16x32xf32>
    %cst_8 = arith.constant 0.000000e+00 : f32
    %11 = vector.broadcast %cst_8 : f32 to vector<16x32xf32>
    %12 = arith.maximumf %10, %11 : vector<16x32xf32>
    %13 = arith.truncf %12 : vector<16x32xf32> to vector<16x32xbf16>
    %cst_9 = arith.constant dense<0.000000e+00> : vector<16x32xf32>
    %14 = tpu.matmul %1, %13, %cst_9 {dimension_numbers = #tpu.dot_dimension_numbers<[1], [0], [0], [1], [0, 0, 1, 1], [], []>} : vector<16x16xbf16>, vector<16x32xbf16>, vector<16x32xf32> -> vector<16x32xf32>
    %15 = arith.truncf %14 : vector<16x32xf32> to vector<16x32xbf16>
    %cst_10 = arith.constant dense<0.000000e+00> : vector<16x4xf32>
    %16 = tpu.matmul %15, %7, %cst_10 {dimension_numbers = #tpu.dot_dimension_numbers<[1], [0], [0], [1], [0, 0, 1, 1], [], []>} : vector<16x32xbf16>, vector<32x4xbf16>, vector<16x4xf32> -> vector<16x4xf32>
    %cst_11 = arith.constant dense<0xFF800000> : vector<16xf32>
    %17 = vector.multi_reduction <maximumf>, %16, %cst_11 [1] : vector<16x4xf32> to vector<16xf32>
    %18 = vector.shape_cast %17 : vector<16xf32> to vector<16x1xf32>
    %19 = vector.broadcast %18 : vector<16x1xf32> to vector<16x4xf32>
    %20 = arith.subf %16, %19 : vector<16x4xf32>
    %21 = math.exp %20 : vector<16x4xf32>
    %cst_12 = arith.constant dense<0.000000e+00> : vector<16xf32>
    %22 = vector.multi_reduction <add>, %21, %cst_12 [1] : vector<16x4xf32> to vector<16xf32>
    %23 = vector.shape_cast %22 : vector<16xf32> to vector<16x1xf32>
    %24 = math.log %23 : vector<16x1xf32>
    %25 = vector.broadcast %24 : vector<16x1xf32> to vector<16x4xf32>
    %26 = arith.subf %20, %25 : vector<16x4xf32>
    %cst_13 = arith.constant 0.000000e+00 : f32
    %27 = vector.broadcast %cst_13 : f32 to vector<16x56xf32>
    %28 = tpu.concatenate %12, %14, %16, %26, %27 in 1 : vector<16x32xf32>, vector<16x32xf32>, vector<16x4xf32>, vector<16x4xf32>, vector<16x56xf32> -> vector<16x128xf32>
    %c0_14 = arith.constant 0 : index
    %c0_15 = arith.constant 0 : index
    %29 = vector.load %arg4[%c0_14, %c0_15] : memref<16x128xf32, #tpu.memory_space<vmem>>, vector<16x128xf32>
    tpu.vector_store %arg4[%c0_14, %c0_15], %28 {strides = array<i32>} : memref<16x128xf32, #tpu.memory_space<vmem>>, vector<16x128xf32>,
    return
  }
}

</mosaic_0001>

<llo_original>
// kernel: matrix_gcn_forward.1
$region0: #{matrix_gcn_forward.1}
  #allocation0 [shape = 'u32[]', space=smem, size = 0x4, offset = 0x4, fixed_abs, tag = 'smem constant byte address 0x4 - core index']
  #allocation1 [shape = 'u32[72,128]{1,0:T(1,128)}', space=vmem, size = 0x9000, scoped, tag = 'internal scratch']
  %s0 = inlined_call_operand.vmem [shape: f32[16,16], index: 0, kind: input, shape index: {}]
  %s1 = inlined_call_operand.vmem [shape: f32[16,8], index: 1, kind: input, shape index: {}]
  %s2 = inlined_call_operand.vmem [shape: f32[8,32], index: 2, kind: input, shape index: {}]
  %s3 = inlined_call_operand.vmem [shape: f32[32,4], index: 3, kind: input, shape index: {}]
  %s4 = inlined_call_operand.vmem [shape: f32[16,128], index: 4, kind: output, shape index: {}]
  %s5 = sld [smem:[#allocation0]]
  $region26: #{matrix_gcn_forward.1} parent=0
    _
  %s7 = ssub.s32 1, %s5
  %s8 = scalar_select 0, %s7, %s5
  // Predicated region
  $region2: #{matrix_gcn_forward.1} parent=0 // pred_check
    _
  $region3: #{matrix_gcn_forward.1} parent=0 // pred_check_branch
    %10 = sbr.rel (0) target = $region5
  $region4: #{matrix_gcn_forward.1} parent=0 // pred_region
    _
  $region5: #{matrix_gcn_forward.1} parent=0 // pred_fallthru
    _
  // Predicated region
  $region6: #{matrix_gcn_forward.1} parent=0 // pred_check
    _
  $region7: #{matrix_gcn_forward.1} parent=0 // pred_check_branch
    %12 = sbr.rel (0) target = $region9
  $region8: #{matrix_gcn_forward.1} parent=0 // pred_region
    _
  $region9: #{matrix_gcn_forward.1} parent=0 // pred_fallthru
    _
  // Predicated region
  $region10: #{matrix_gcn_forward.1} parent=0 // pred_check
    _
  $region11: #{matrix_gcn_forward.1} parent=0 // pred_check_branch
    %14 = sbr.rel (0) target = $region13
  $region12: #{matrix_gcn_forward.1} parent=0 // pred_region
    _
  $region13: #{matrix_gcn_forward.1} parent=0 // pred_fallthru
    _
  // Predicated region
  $region14: #{matrix_gcn_forward.1} parent=0 // pred_check
    _
  $region15: #{matrix_gcn_forward.1} parent=0 // pred_check_branch
    %16 = sbr.rel (0) target = $region17
  $region16: #{matrix_gcn_forward.1} parent=0 // pred_region
    _
  $region17: #{matrix_gcn_forward.1} parent=0 // pred_fallthru
    _
  %v18 = vld [vmem:[%s0] sm:$0xff]
  %v19 = vld [vmem:[%s0 + $0x8] sm:$0xff]
  %v20 = vpack.c.bf16 %v19, %v18
  %v21 = vld [vmem:[%s1] sm:$0xff]
  %v22 = vld [vmem:[%s1 + $0x8] sm:$0xff]
  %v23 = vpack.c.bf16 %v22, %v21
  %v24 = vld [vmem:[%s2] sm:$0xff]
  %v25 = vpack.c.bf16 %v24, %v24
  %v26 = vld [vmem:[%s3] sm:$0xff]
  %v27 = vld [vmem:[%s3 + $0x8] sm:$0xff]
  %v28 = vld [vmem:[%s3 + $0x10] sm:$0xff]
  %v29 = vld [vmem:[%s3 + $0x18] sm:$0xff]
  %v30 = vpack.c.bf16 %v27, %v26
  %v31 = vpack.c.bf16 %v29, %v28
  %vm32 = vcmask 130048
  %v34 = vsel %vm32, %v20, 0
  %36 = vmatpush.bf16.msra.mxu0 0
  %37 = vmatpush.bf16.msra.mxu0 0
  %38 = vmatpush.bf16.msra.mxu0 0
  %39 = vmatpush.bf16.msra.mxu0 0
  %40 = vmatpush.bf16.msra.mxu0 0
  %41 = vmatpush.bf16.msra.mxu0 0
  %42 = vmatpush.bf16.msra.mxu0 0
  %43 = vmatpush.bf16.msra.mxu0 %v23
  %44 = vmatmul.bf16.gmra.mxu0 %v34
  %v45 = vpop.f32.mrf.mxu0
  %v46 = vadd.f32 0.0, %v45
  %v47 = vpop.f32.mrf.mxu0
  %v48 = vadd.f32 0.0, %v47
  %49 = vdwg.mxu0
  %v50 = vpack.c.bf16 %v48, %v46
  %vm51 = vcmask 64512
  %v53 = vsel %vm51, %v50, 0
  %vm55 = vcmask 1043456
  %v57 = vsel %vm55, %v25, 0
  %59 = vmatpush.bf16.msra.mxu0 0
  %60 = vmatpush.bf16.msra.mxu0 0
  %61 = vmatpush.bf16.msra.mxu0 0
  %62 = vmatpush.bf16.msra.mxu0 0
  %63 = vmatpush.bf16.msra.mxu0 0
  %64 = vmatpush.bf16.msra.mxu0 0
  %65 = vmatpush.bf16.msra.mxu0 0
  %66 = vmatpush.bf16.msra.mxu0 %v57
  %67 = vmatmul.bf16.gmra.mxu0 %v53
  %v68 = vpop.f32.mrf.mxu0
  %v69 = vadd.f32 0.0, %v68
  %v70 = vpop.f32.mrf.mxu0
  %v71 = vadd.f32 0.0, %v70
  %72 = vdwg.mxu0
  %v73 = vmax.f32 %v69, 0.0
  %v74 = vmax.f32 %v71, 0.0
  %v75 = vpack.c.bf16 %v74, %v73
  %76 = vmatpush.bf16.msra.mxu0 0
  %77 = vmatpush.bf16.msra.mxu0 0
  %78 = vmatpush.bf16.msra.mxu0 0
  %79 = vmatpush.bf16.msra.mxu0 0
  %80 = vmatpush.bf16.msra.mxu0 0
  %81 = vmatpush.bf16.msra.mxu0 0
  %82 = vmatpush.bf16.msra.mxu0 0
  %83 = vmatpush.bf16.msra.mxu0 %v75
  %84 = vmatmul.bf16.gmra.mxu0 %v34
  %v85 = vpop.f32.mrf.mxu0
  %v86 = vadd.f32 0.0, %v85
  %v87 = vpop.f32.mrf.mxu0
  %v88 = vadd.f32 0.0, %v87
  %89 = vdwg.mxu0
  %v90 = vpack.c.bf16 %v88, %v86
  %vm91 = vcmask 261120
  %v93 = vsel %vm91, %v90, 0
  %95 = vmatpush.bf16.msra.mxu0 0
  %96 = vmatpush.bf16.msra.mxu0 0
  %97 = vmatpush.bf16.msra.mxu0 0
  %98 = vmatpush.bf16.msra.mxu0 0
  %99 = vmatpush.bf16.msra.mxu0 0
  %100 = vmatpush.bf16.msra.mxu0 0
  %101 = vmatpush.bf16.msra.mxu0 %v31
  %102 = vmatpush.bf16.msra.mxu0 %v30
  %103 = vmatmul.bf16.gmra.mxu0 %v93
  %v104 = vpop.f32.mrf.mxu0
  %v105 = vadd.f32 0.0, %v104
  %v106 = vpop.f32.mrf.mxu0
  %v107 = vadd.f32 0.0, %v106
  %108 = vdwg.mxu0
  %vm109 = vcmask 31744
  %v110 = vsel %vm109, %v105, -inf
  %111 = vmax.xlane.f32.xlu0 %v110
  %v112 = vpop.xlane.xlu0 %111
  %v113 = vsel %vm109, %v107, -inf
  %114 = vmax.xlane.f32.xlu0 %v113
  %v115 = vpop.xlane.xlu0 %114
  %v116 = vsub.f32 %v105, %v112
  %v117 = vsub.f32 %v107, %v115
  %v118 = vmul.f32 %v116, 1.442695
  %v119 = vpow.pop %v118
  %v120 = vmul.f32 %v117, 1.442695
  %v121 = vpow.pop %v120
  %v122 = vsel %vm109, %v119, 0.0
  %123 = vadd.xlane.f32.xlu0 %v122
  %v124 = vpop.xlane.xlu0 %123
  %v125 = vsel %vm109, %v121, 0.0
  %126 = vadd.xlane.f32.xlu0 %v125
  %v127 = vpop.xlane.xlu0 %126
  %v128 = vlog2.pop %v124
  %v129 = vmul.f32 %v128, 0.6931472
  %v130 = vlog2.pop %v127
  %v131 = vmul.f32 %v130, 0.6931472
  %v132 = vsub.f32 %v116, %v129
  %v133 = vsub.f32 %v117, %v131
  %136 = vrot.lane.b32.xlu0 %v86, 32
  %v137 = vpop.permute.xlu0 %136
  %138 = vrot.lane.b32.xlu0 %v88, 32
  %v139 = vpop.permute.xlu0 %138
  %144 = vrot.lane.b32.xlu0 %v105, 64
  %v145 = vpop.permute.xlu0 %144
  %146 = vrot.lane.b32.xlu0 %v107, 64
  %v147 = vpop.permute.xlu0 %146
  %152 = vrot.lane.b32.xlu0 %v132, 68
  %v153 = vpop.permute.xlu0 %152
  %154 = vrot.lane.b32.xlu0 %v133, 68
  %v155 = vpop.permute.xlu0 %154
  %v158 = vsel %vm91, %v73, %v137
  %v159 = vsel %vm91, %v74, %v139
  %vm160 = vcmask 523264
  %v161 = vsel %vm160, %v158, %v145
  %v162 = vsel %vm160, %v159, %v147
  %vm163 = vcmask 556032
  %v164 = vsel %vm163, %v161, %v153
  %v165 = vsel %vm163, %v162, %v155
  %vm166 = vcmask 588800
  %v167 = vsel %vm166, %v164, 0.0
  %v168 = vsel %vm166, %v165, 0.0
  %169 = vst [vmem:[%s4] sm:$0xff] %v167
  %170 = vst [vmem:[%s4 + $0x8] sm:$0xff] %v168
  // Predicated region
  $region18: #{matrix_gcn_forward.1} parent=0 // pred_check
    _
  $region19: #{matrix_gcn_forward.1} parent=0 // pred_check_branch
    %172 = sbr.rel (0) target = $region21
  $region20: #{matrix_gcn_forward.1} parent=0 // pred_region
    _
  $region21: #{matrix_gcn_forward.1} parent=0 // pred_fallthru
    _
  // Predicated region
  $region22: #{matrix_gcn_forward.1} parent=0 // pred_check
    _
  $region23: #{matrix_gcn_forward.1} parent=0 // pred_check_branch
    %174 = sbr.rel (0) target = $region25
  $region24: #{matrix_gcn_forward.1} parent=0 // pred_region
    _
  $region25: #{matrix_gcn_forward.1} parent=0 // pred_fallthru
    _

</llo_original>
